<compile_context>
chip_gen: v5e
topology: v5e:2x2
jax: 0.10.0
libtpu: 0.0.40
codegen_flags: <defaults>
</compile_context>

<pallas_src>
import math

import jax
import jax.numpy as jnp
from jax import lax
from jax.experimental import pallas as pl
from jax.experimental.pallas import tpu as pltpu


def _round_up(x, m):
    return ((x + m - 1) // m) * m


def _block_diag(m, p):
    """(r, c) -> (p*r, p*c) block-diagonal replication of m (prep-time only)."""
    if p == 1:
        return m
    r, c = m.shape
    out = jnp.zeros((p * r, p * c), m.dtype)
    for k in range(p):
        out = out.at[k * r:(k + 1) * r, k * c:(k + 1) * c].set(m)
    return out


def _pack_factor(D):
    """Pack P logical rows into one 128-lane row when D divides 128."""
    return (128 // D) if (D < 128 and 128 % D == 0) else 1


def prepare_node_func_params(params, z_dim, h_dim, matmul_dtype=jnp.bfloat16):
    """One-time weight prep (call once per parameter set, outside the ODE loop).

    Returns (w1_bd, b1_t, w2_bd, b2_t):
      w1_bd: (P*D, P*H) block-diagonal first linear, in matmul_dtype
      b1_t : (1, P*H)   f32
      w2_bd: (P*H, P*D) block-diagonal second linear with zero cols for the
                        h-block folded in, in matmul_dtype
      b2_t : (1, P*D)   f32
    """
    w1, b1, w2, b2 = params  # w1:(D,H) b1:(H,) w2:(H,z_dim) b2:(z_dim,)
    D = z_dim + h_dim
    H = w1.shape[1]
    P = _pack_factor(D)

    # Fold the zero h-block of the output into the second linear: (H, z_dim) -> (H, D).
    w2p = jnp.concatenate([w2, jnp.zeros((H, h_dim), w2.dtype)], axis=1)
    b2p = jnp.concatenate([b2, jnp.zeros((h_dim,), b2.dtype)])

    w1_bd = _block_diag(w1.astype(jnp.float32), P).astype(matmul_dtype)   # (P*D, P*H)
    w2_bd = _block_diag(w2p.astype(jnp.float32), P).astype(matmul_dtype)  # (P*H, P*D)
    b1_t = jnp.tile(b1.astype(jnp.float32), P).reshape(1, P * H)
    b2_t = jnp.tile(b2p.astype(jnp.float32), P).reshape(1, P * D)
    return (w1_bd, b1_t, w2_bd, b2_t)


def _node_func_kernel(x_ref, w1_ref, b1_ref, w2_ref, b2_ref, o_ref):
    # x_ref : (TB, P*D)   packed input tile (P logical rows per packed row)
    # w1_ref: (P*D, P*H)  block-diagonal first linear (matmul dtype)
    # b1_ref: (1,   P*H)  f32
    # w2_ref: (P*H, P*D)  block-diagonal second linear (zero h-cols folded in)
    # b2_ref: (1,   P*D)  f32
    # o_ref : (TB, P*D)   dense packed output tile
    mm_dtype = w1_ref.dtype
    x = x_ref[...].astype(mm_dtype)

    # Linear 1 on the MXU (f32 accumulate) + bias in f32.
    pre = jnp.dot(x, w1_ref[...], preferred_element_type=jnp.float32) + b1_ref[...]
    # Exact (erf-based) GELU in f32, matching torch.nn.GELU(approximate='none').
    act = 0.5 * pre * (1.0 + lax.erf(pre * (1.0 / math.sqrt(2.0))))
    # Linear 2 on the MXU + bias; zero-weight columns produce the zero h-block.
    fz = jnp.dot(act.astype(mm_dtype), w2_ref[...],
                 preferred_element_type=jnp.float32) + b2_ref[...]

    o_ref[...] = fz.astype(o_ref.dtype)  # one unmasked, lane-dense store


def node_func_forward(t, zh, prepped, z_dim, h_dim, *, tile_rows=8192):
    """Pallas forward of node_func_wide_multi_lineage_rna. `t` is unused (as in PyTorch).

    `prepped` comes from prepare_node_func_params().
    """
    del t
    w1_bd, b1_t, w2_bd, b2_t = prepped
    D = z_dim + h_dim
    P = w1_bd.shape[0] // D
    H = w1_bd.shape[1] // P
    orig_shape = zh.shape
    assert orig_shape[-1] == D

    zh2d = zh.reshape(-1, D)
    B = zh2d.shape[0]

    # Pad only to a multiple of the pack factor P (<= P-1 rows), never to a
    # tile multiple — the ragged final grid block is handled by Pallas.
    rem = (-B) % P
    if rem:
        zh2d = jnp.pad(zh2d, ((0, rem), (0, 0)))
    Bp = (B + rem) // P
    xp = zh2d.reshape(Bp, P * D)                 # free row-major view

    # --- batch tile selection -----------------------------------------------
    elt = jnp.dtype(zh.dtype).itemsize
    row_bytes = P * D * elt
    # 2 x (input + output) pipelined blocks capped at ~16 MiB (safe under the
    # explicitly raised 32 MiB scoped-VMEM limit on v5e/v6e/v7x).
    tb_vmem = max(8, ((16 * 1024 * 1024) // (4 * row_bytes)) // 8 * 8)
    # At least 2 grid steps whenever possible so v7x's two TensorCores both work.
    tb_mega = _round_up(pl.cdiv(Bp, 2), 8)
    TB = max(8, min(_round_up(tile_rows, 8), tb_vmem, tb_mega))

    grid = (pl.cdiv(Bp, TB),)

    flops = 4 * Bp * (P * D) * (P * H)           # two (P*D)x(P*H) matmuls per packed row
    bytes_accessed = (elt * (xp.size + Bp * P * D)
                      + sum(int(a.size) * jnp.dtype(a.dtype).itemsize
                            for a in (w1_bd, b1_t, w2_bd, b2_t)))

    out = pl.pallas_call(
        _node_func_kernel,
        out_shape=jax.ShapeDtypeStruct((Bp, P * D), zh.dtype),
        grid=grid,
        in_specs=[
            pl.BlockSpec((TB, P * D), lambda i: (i, 0)),       # packed activations
            pl.BlockSpec((P * D, P * H), lambda i: (0, 0)),    # resident weights
            pl.BlockSpec((1, P * H), lambda i: (0, 0)),
            pl.BlockSpec((P * H, P * D), lambda i: (0, 0)),
            pl.BlockSpec((1, P * D), lambda i: (0, 0)),
        ],
        out_specs=pl.BlockSpec((TB, P * D), lambda i: (i, 0)),
        compiler_params=pltpu.CompilerParams(
            dimension_semantics=("parallel",),
            vmem_limit_bytes=32 * 1024 * 1024,
        ),
        cost_estimate=pl.CostEstimate(
            flops=flops,
            transcendentals=Bp * P * H,
            bytes_accessed=bytes_accessed,
        ),
    )(xp, w1_bd, b1_t, w2_bd, b2_t)

    out2d = out.reshape(Bp * P, D)
    if rem:                                      # slice only when B % P != 0
        out2d = out2d[:B]
    return out2d.reshape(orig_shape)


def init_params(key, z_dim, h_dim, num_hidden, dtype=jnp.float32):
    """Matches PyTorch init: weights ~ N(0, 0.01), biases = 0."""
    D = z_dim + h_dim
    k1, k2 = jax.random.split(key)
    w1 = (0.01 * jax.random.normal(k1, (D, num_hidden))).astype(dtype)
    b1 = jnp.zeros((num_hidden,), dtype)
    w2 = (0.01 * jax.random.normal(k2, (num_hidden, z_dim))).astype(dtype)
    b2 = jnp.zeros((z_dim,), dtype)
    return (w1, b1, w2, b2)


def _reference(zh, params, z_dim, matmul_dtype=jnp.float32):
    """Pure-JAX reference; matmul_dtype mirrors the kernel's MXU operand dtype."""
    w1, b1, w2, b2 = params
    x = zh.astype(matmul_dtype)
    pre = jnp.dot(x, w1.astype(matmul_dtype),
                  preferred_element_type=jnp.float32) + b1.astype(jnp.float32)
    act = 0.5 * pre * (1.0 + lax.erf(pre / jnp.sqrt(2.0)))
    fz = jnp.dot(act.astype(matmul_dtype), w2.astype(matmul_dtype),
                 preferred_element_type=jnp.float32) + b2.astype(jnp.float32)
    fz = fz.astype(zh.dtype)
    zeros_h = jnp.zeros(zh.shape[:-1] + (zh.shape[-1] - z_dim,), zh.dtype)
    return jnp.concatenate([fz, zeros_h], axis=-1)


if __name__ == "__main__":
    z_dim, h_dim, num_hidden = 24, 8, 32
    batch = 8

    key = jax.random.PRNGKey(0)
    kp, kz = jax.random.split(key)
    params = init_params(kp, z_dim, h_dim, num_hidden)
    zh = jax.random.normal(kz, (batch, z_dim + h_dim), dtype=jnp.float32)
    t = jnp.float32(0.0)  # unused, mirrors the PyTorch signature

    # 1) f32-MXU path: bit-matches the exact (erf) reference.
    prepped_f32 = prepare_node_func_params(params, z_dim, h_dim,
                                           matmul_dtype=jnp.float32)
    out_f32 = jax.block_until_ready(
        node_func_forward(t, zh, prepped_f32, z_dim, h_dim))
    ref_f32 = _reference(zh, params, z_dim)
    assert out_f32.shape == zh.shape
    assert jnp.allclose(out_f32, ref_f32, atol=1e-5, rtol=1e-5)

    # 2) Default bf16-operand MXU path (f32 accumulate, f32 GELU).
    prepped = prepare_node_func_params(params, z_dim, h_dim)  # bf16 matmul operands
    out = jax.block_until_ready(node_func_forward(t, zh, prepped, z_dim, h_dim))
    ref_bf16 = _reference(zh, params, z_dim, matmul_dtype=jnp.bfloat16)
    assert jnp.allclose(out, ref_bf16, atol=2e-5, rtol=1e-3)   # precision-matched
    assert jnp.allclose(out, ref_f32, atol=1e-3, rtol=5e-2)    # semantics sanity

    # 3) Ragged batch: not a multiple of the pack factor or the tile.
    zh_big = jax.random.normal(jax.random.PRNGKey(1),
                               (3, 7, z_dim + h_dim), jnp.float32)
    out_big = jax.block_until_ready(
        node_func_forward(t, zh_big, prepped_f32, z_dim, h_dim))
    assert out_big.shape == zh_big.shape
    assert jnp.allclose(out_big, _reference(zh_big, params, z_dim),
                        atol=1e-5, rtol=1e-5)

    print("KERNEL_OK")
</pallas_src>

<mosaic_0001>
module attributes {stable_mosaic.version = 11 : i64} {
  func.func @_node_func_kernel(%arg0: i32, %arg1: memref<8x128xf32, #tpu.memory_space<vmem>>, %arg2: memref<128x128xf32, #tpu.memory_space<vmem>>, %arg3: memref<1x128xf32, #tpu.memory_space<vmem>>, %arg4: memref<128x128xf32, #tpu.memory_space<vmem>>, %arg5: memref<1x128xf32, #tpu.memory_space<vmem>>, %arg6: memref<8x128xf32, #tpu.memory_space<vmem>>) attributes {dimension_semantics = [#tpu.dimension_semantics<parallel>], iteration_bounds = array<i64: 1>, scalar_prefetch = 0 : i64, scratch_operands = 0 : i64, tpu.core_type = #tpu.core_type<tc>, window_params = [{transform_indices = @transform_0, window_bounds = array<i64: 8, 128>}, {pipeline_mode = #tpu.pipeline_mode<synchronous>, transform_indices = @transform_1, window_bounds = array<i64: 128, 128>}, {pipeline_mode = #tpu.pipeline_mode<synchronous>, transform_indices = @transform_2, window_bounds = array<i64: 1, 128>}, {pipeline_mode = #tpu.pipeline_mode<synchronous>, transform_indices = @transform_3, window_bounds = array<i64: 128, 128>}, {pipeline_mode = #tpu.pipeline_mode<synchronous>, transform_indices = @transform_4, window_bounds = array<i64: 1, 128>}, {transform_indices = @transform_5, window_bounds = array<i64: 8, 128>}]} {
    %c0 = arith.constant 0 : index
    %c0_0 = arith.constant 0 : index
    %0 = vector.load %arg1[%c0, %c0_0] : memref<8x128xf32, #tpu.memory_space<vmem>>, vector<8x128xf32>
    %c0_1 = arith.constant 0 : index
    %c0_2 = arith.constant 0 : index
    %1 = vector.load %arg2[%c0_1, %c0_2] : memref<128x128xf32, #tpu.memory_space<vmem>>, vector<128x128xf32>
    %cst = arith.constant dense<0.000000e+00> : vector<8x128xf32>
    %2 = tpu.matmul %0, %1, %cst {dimension_numbers = #tpu.dot_dimension_numbers<[1], [0], [0], [1], [0, 0, 1, 1], [], []>} : vector<8x128xf32>, vector<128x128xf32>, vector<8x128xf32> -> vector<8x128xf32>
    %c0_3 = arith.constant 0 : index
    %c0_4 = arith.constant 0 : index
    %3 = vector.load %arg3[%c0_3, %c0_4] : memref<1x128xf32, #tpu.memory_space<vmem>>, vector<1x128xf32>
    %4 = vector.broadcast %3 : vector<1x128xf32> to vector<8x128xf32>
    %5 = arith.addf %2, %4 : vector<8x128xf32>
    %cst_5 = arith.constant 5.000000e-01 : f32
    %6 = vector.broadcast %cst_5 : f32 to vector<8x128xf32>
    %7 = arith.mulf %6, %5 : vector<8x128xf32>
    %cst_6 = arith.constant 0.707106769 : f32
    %8 = vector.broadcast %cst_6 : f32 to vector<8x128xf32>
    %9 = arith.mulf %5, %8 : vector<8x128xf32>
    %10 = math.erf %9 : vector<8x128xf32>
    %cst_7 = arith.constant 1.000000e+00 : f32
    %11 = vector.broadcast %cst_7 : f32 to vector<8x128xf32>
    %12 = arith.addf %11, %10 : vector<8x128xf32>
    %13 = arith.mulf %7, %12 : vector<8x128xf32>
    %c0_8 = arith.constant 0 : index
    %c0_9 = arith.constant 0 : index
    %14 = vector.load %arg4[%c0_8, %c0_9] : memref<128x128xf32, #tpu.memory_space<vmem>>, vector<128x128xf32>
    %cst_10 = arith.constant dense<0.000000e+00> : vector<8x128xf32>
    %15 = tpu.matmul %13, %14, %cst_10 {dimension_numbers = #tpu.dot_dimension_numbers<[1], [0], [0], [1], [0, 0, 1, 1], [], []>} : vector<8x128xf32>, vector<128x128xf32>, vector<8x128xf32> -> vector<8x128xf32>
    %c0_11 = arith.constant 0 : index
    %c0_12 = arith.constant 0 : index
    %16 = vector.load %arg5[%c0_11, %c0_12] : memref<1x128xf32, #tpu.memory_space<vmem>>, vector<1x128xf32>
    %17 = vector.broadcast %16 : vector<1x128xf32> to vector<8x128xf32>
    %18 = arith.addf %15, %17 : vector<8x128xf32>
    %c0_13 = arith.constant 0 : index
    %c0_14 = arith.constant 0 : index
    %19 = vector.load %arg6[%c0_13, %c0_14] : memref<8x128xf32, #tpu.memory_space<vmem>>, vector<8x128xf32>
    tpu.vector_store %arg6[%c0_13, %c0_14], %18 {strides = array<i32>} : memref<8x128xf32, #tpu.memory_space<vmem>>, vector<8x128xf32>,
    return
  }
  func.func @transform_0(%arg0: i32) -> (i32, i32) {
    %c0_i32 = arith.constant 0 : i32
    %c0_i32_0 = arith.constant 0 : i32
    return %arg0, %c0_i32 : i32, i32
  }
  func.func @transform_1(%arg0: i32) -> (i32, i32) {
    %c0_i32 = arith.constant 0 : i32
    %c0_i32_0 = arith.constant 0 : i32
    %c0_i32_1 = arith.constant 0 : i32
    return %c0_i32, %c0_i32_0 : i32, i32
  }
  func.func @transform_2(%arg0: i32) -> (i32, i32) {
    %c0_i32 = arith.constant 0 : i32
    %c0_i32_0 = arith.constant 0 : i32
    %c0_i32_1 = arith.constant 0 : i32
    return %c0_i32, %c0_i32_0 : i32, i32
  }
  func.func @transform_3(%arg0: i32) -> (i32, i32) {
    %c0_i32 = arith.constant 0 : i32
    %c0_i32_0 = arith.constant 0 : i32
    %c0_i32_1 = arith.constant 0 : i32
    return %c0_i32, %c0_i32_0 : i32, i32
  }
  func.func @transform_4(%arg0: i32) -> (i32, i32) {
    %c0_i32 = arith.constant 0 : i32
    %c0_i32_0 = arith.constant 0 : i32
    %c0_i32_1 = arith.constant 0 : i32
    return %c0_i32, %c0_i32_0 : i32, i32
  }
  func.func @transform_5(%arg0: i32) -> (i32, i32) {
    %c0_i32 = arith.constant 0 : i32
    %c0_i32_0 = arith.constant 0 : i32
    return %arg0, %c0_i32 : i32, i32
  }
}

</mosaic_0001>

<llo_original>
// kernel: tpu_custom_call.1
$region0: #{tpu_custom_call.1}
  #allocation0 [shape = 'u32[]', space=smem, size = 0x4, offset = 0x4, fixed_abs, tag = 'smem constant byte address 0x4 - core index']
  #allocation1 [shape = 'u32[72,128]{1,0:T(1,128)}', space=vmem, size = 0x9000, scoped, tag = 'internal scratch']
  %s0 = inlined_call_operand.hbm [shape: f32[2,128], index: 0, kind: input, shape index: {}]
  %s1 = inlined_call_operand.hbm [shape: f32[128,128], index: 1, kind: input, shape index: {}]
  %s2 = inlined_call_operand.vmem [shape: f32[1,128], index: 2, kind: input, shape index: {}]
  %s3 = inlined_call_operand.hbm [shape: f32[128,128], index: 3, kind: input, shape index: {}]
  %s4 = inlined_call_operand.vmem [shape: f32[1,128], index: 4, kind: input, shape index: {}]
  %s5 = inlined_call_operand.hbm [shape: f32[2,128], index: 5, kind: output, shape index: {}]
  %s6 = sld [smem:[#allocation0]]
  $region42: #{tpu_custom_call.1} parent=0
    _
  %s8 = ssub.s32 1, %s6
  %s9 = scalar_select 0, %s8, %s6
  $region1: #{tpu_custom_call.1} parent=0
    #allocation2 [shape = 'u8[4096]{0}', space=vmem, size = 0x1000, scoped, tag = 'input window, operand 0, single buffered']
    #allocation3 [shape = 's32[1]{0}', space=sflag, size = 0x4, scoped, tag = 'scoped memory for tpu_custom_call.1']
    #allocation4 [shape = 's32[1]{0}', space=sflag, size = 0x4, scoped, tag = 'scoped memory for tpu_custom_call.1']
    #allocation5 [shape = 'u8[65536]{0}', space=vmem, size = 0x10000, scoped, tag = 'input window, operand 1, single buffered']
    #allocation6 [shape = 's32[1]{0}', space=sflag, size = 0x4, scoped, tag = 'scoped memory for tpu_custom_call.1']
    #allocation7 [shape = 'u8[65536]{0}', space=vmem, size = 0x10000, scoped, tag = 'input window, operand 3, single buffered']
    #allocation8 [shape = 'u8[4096]{0}', space=vmem, size = 0x1000, scoped, tag = 'output window, operand 0, single buffered']
    %10 = vsyncpa [#allocation3], 0
    %11 = vsyncpa [#allocation6], 0
    %12 = vsyncpa [#allocation4], 0
    // Predicated region
    $region2: #{tpu_custom_call.1} parent=1 // pred_check
      _
    $region3: #{tpu_custom_call.1} parent=1 // pred_check_branch
      %14 = sbr.rel (0) target = $region5
    $region4: #{tpu_custom_call.1} parent=1 // pred_region
      %16 = vsyncadd [#allocation3], 96
      %s17 = sshll.u32 %s0, 4
      %s18 = int_to_ptr.hbm [resolvable:$true] %s17
      %s19 = sshll.u32 [#allocation2], 4
      %s20 = int_to_ptr.vmem [resolvable:$true] %s19
      %25 = dma.hbm_to_vmem [thread:$0]  %s18, 32, %s20, [#allocation3], 32, 32, 2
    $region5: #{tpu_custom_call.1} parent=1 // pred_fallthru
      _
    // Predicated region
    $region6: #{tpu_custom_call.1} parent=1 // pred_check
      _
    $region7: #{tpu_custom_call.1} parent=1 // pred_check_branch
      %27 = sbr.rel (0) target = $region9
    $region8: #{tpu_custom_call.1} parent=1 // pred_region
      %29 = vsyncadd [#allocation6], 0
      %s30 = sshll.u32 %s1, 4
      %s31 = int_to_ptr.hbm [resolvable:$true] %s30
      %s32 = sshll.u32 [#allocation5], 4
      %s33 = int_to_ptr.vmem [resolvable:$true] %s32
      %38 = dma.hbm_to_vmem [thread:$0]  %s31, 2048, %s33, [#allocation6], 128, 128, 8
    $region9: #{tpu_custom_call.1} parent=1 // pred_fallthru
      _
    // Predicated region
    $region10: #{tpu_custom_call.1} parent=1 // pred_check
      _
    $region11: #{tpu_custom_call.1} parent=1 // pred_check_branch
      %40 = sbr.rel (0) target = $region13
    $region12: #{tpu_custom_call.1} parent=1 // pred_region
      _
    $region13: #{tpu_custom_call.1} parent=1 // pred_fallthru
      _
    // Predicated region
    $region14: #{tpu_custom_call.1} parent=1 // pred_check
      _
    $region15: #{tpu_custom_call.1} parent=1 // pred_check_branch
      %42 = sbr.rel (0) target = $region17
    $region16: #{tpu_custom_call.1} parent=1 // pred_region
      %44 = vsyncadd [#allocation6], 0
      %s45 = sshll.u32 %s3, 4
      %s46 = int_to_ptr.hbm [resolvable:$true] %s45
      %s47 = sshll.u32 [#allocation7], 4
      %s48 = int_to_ptr.vmem [resolvable:$true] %s47
      %53 = dma.hbm_to_vmem [thread:$0]  %s46, 2048, %s48, [#allocation6], 128, 128, 8
    $region17: #{tpu_custom_call.1} parent=1 // pred_fallthru
      _
    // Predicated region
    $region18: #{tpu_custom_call.1} parent=1 // pred_check
      _
    $region19: #{tpu_custom_call.1} parent=1 // pred_check_branch
      %55 = sbr.rel (0) target = $region21
    $region20: #{tpu_custom_call.1} parent=1 // pred_region
      _
    $region21: #{tpu_custom_call.1} parent=1 // pred_fallthru
      _
    // Predicated region
    $region22: #{tpu_custom_call.1} parent=1 // pred_check
      _
    $region23: #{tpu_custom_call.1} parent=1 // pred_check_branch
      %57 = sbr.rel (0) target = $region25
    $region24: #{tpu_custom_call.1} parent=1 // pred_region
      %59 = dma.done [#allocation3], 128
    $region25: #{tpu_custom_call.1} parent=1 // pred_fallthru
      _
    // Predicated region
    $region26: #{tpu_custom_call.1} parent=1 // pred_check
      _
    $region27: #{tpu_custom_call.1} parent=1 // pred_check_branch
      %61 = sbr.rel (0) target = $region29
    $region28: #{tpu_custom_call.1} parent=1 // pred_region
      %63 = dma.done [#allocation6], 2048
    $region29: #{tpu_custom_call.1} parent=1 // pred_fallthru
      _
    // Predicated region
    $region30: #{tpu_custom_call.1} parent=1 // pred_check
      _
    $region31: #{tpu_custom_call.1} parent=1 // pred_check_branch
      %65 = sbr.rel (0) target = $region33
    $region32: #{tpu_custom_call.1} parent=1 // pred_region
      %67 = dma.done [#allocation6], 2048
    $region33: #{tpu_custom_call.1} parent=1 // pred_fallthru
      _
    %v68 = vld [vmem:[#allocation2] sm:$0xff]
    %v69 = vld [vmem:[#allocation5] sm:$0xff]
    %v70 = vld [vmem:[#allocation5 + $0x8] sm:$0xff]
    %v71 = vld [vmem:[#allocation5 + $0x10] sm:$0xff]
    %v72 = vld [vmem:[#allocation5 + $0x18] sm:$0xff]
    %v73 = vld [vmem:[#allocation5 + $0x20] sm:$0xff]
    %v74 = vld [vmem:[#allocation5 + $0x28] sm:$0xff]
    %v75 = vld [vmem:[#allocation5 + $0x30] sm:$0xff]
    %v76 = vld [vmem:[#allocation5 + $0x38] sm:$0xff]
    %v77 = vld [vmem:[#allocation5 + $0x40] sm:$0xff]
    %v78 = vld [vmem:[#allocation5 + $0x48] sm:$0xff]
    %v79 = vld [vmem:[#allocation5 + $0x50] sm:$0xff]
    %v80 = vld [vmem:[#allocation5 + $0x58] sm:$0xff]
    %v81 = vld [vmem:[#allocation5 + $0x60] sm:$0xff]
    %v82 = vld [vmem:[#allocation5 + $0x68] sm:$0xff]
    %v83 = vld [vmem:[#allocation5 + $0x70] sm:$0xff]
    %v84 = vld [vmem:[#allocation5 + $0x78] sm:$0xff]
    %v85 = vld [vmem:[%s2] sm:$0x1]
    %v87 = vperm.slane %v85, 0
    %89 = vmatpush.msra.mxu0 %v84
    %90 = vmatpush.msra.mxu0 %v83
    %91 = vmatpush.msra.mxu0 %v82
    %92 = vmatpush.msra.mxu0 %v81
    %93 = vmatpush.msra.mxu0 %v80
    %94 = vmatpush.msra.mxu0 %v79
    %95 = vmatpush.msra.mxu0 %v78
    %96 = vmatpush.msra.mxu0 %v77
    %97 = vmatpush.msra.mxu0 %v76
    %98 = vmatpush.msra.mxu0 %v75
    %99 = vmatpush.msra.mxu0 %v74
    %100 = vmatpush.msra.mxu0 %v73
    %101 = vmatpush.msra.mxu0 %v72
    %102 = vmatpush.msra.mxu0 %v71
    %103 = vmatpush.msra.mxu0 %v70
    %104 = vmatpush.msra.mxu0 %v69
    %105 = vmatmul.f32.gmra.mxu0 %v68
    %v106 = vpop.f32.mrf.mxu0
    %v107 = vadd.f32 %v87, %v106
    %108 = vdwg.mxu0
    %v109 = vmul.f32 %v107, 0.5
    %v110 = vmul.f32 %v107, 0.70710677
    %v111 = vmul.f32 %v110, %v110
    %v112 = vmin.f32 16.0, %v111
    %v113 = vmul.f32 %v112, 2.1237322e-06
    %v114 = vadd.f32 %v113, 0.00028619796
    %v115 = vmul.f32 %v112, %v114
    %v116 = vadd.f32 %v115, 0.0036580483
    %v117 = vmul.f32 %v112, %v116
    %v118 = vadd.f32 %v117, 0.05243302
    %v119 = vmul.f32 %v112, %v118
    %v120 = vadd.f32 %v119, 0.18741608
    %v121 = vmul.f32 %v112, %v120
    %v122 = vadd.f32 %v121, 1.1283791
    %v123 = vmul.f32 %v110, %v122
    %v124 = vmul.f32 %v112, 3.8918573e-05
    %v125 = vadd.f32 %v124, 0.001143296
    %v126 = vmul.f32 %v112, %v125
    %v127 = vadd.f32 %v126, 0.014752088
    %v128 = vmul.f32 %v112, %v127
    %v129 = vadd.f32 %v128, 0.112945676
    %v130 = vmul.f32 %v112, %v129
    %v131 = vadd.f32 %v130, 0.4994258
    %v132 = vmul.f32 %v112, %v131
    %v133 = vadd.f32 %v132, 1.0
    %v134 = vrcp.pop %v133
    %v135 = vmul.f32 %v133, %v134
    %v136 = vsub.f32 1.0, %v135
    %v137 = vmul.f32 %v134, %v136
    %v138 = vadd.f32 %v134, %v137
    %vm139 = vweird.f32 %v133
    %vm140 = vweird.f32 %v134
    %vm141 = vmor %vm139, %vm140
    %v142 = vsel %vm141, %v134, %v138
    %v143 = vand.u32 2147483647, %v133
    %vm144 = vcmp.eq.f32.partialorder %v143, 8.507059e+37
    %v145 = vand.u32 %v133, 2147483648
    %v146 = vor.u32 1.1754944e-38, %v145
    %v147 = vsel %vm144, %v146, %v142
    %v148 = vmul.f32 %v123, %v147
    %v149 = vmin.f32 %v148, 1.0
    %v150 = vmax.f32 %v149, -1.0
    %v151 = vadd.f32 %v150, 1.0
    %v152 = vmul.f32 %v109, %v151
    %v153 = vld [vmem:[#allocation7] sm:$0xff]
    %v154 = vld [vmem:[#allocation7 + $0x8] sm:$0xff]
    %v155 = vld [vmem:[#allocation7 + $0x10] sm:$0xff]
    %v156 = vld [vmem:[#allocation7 + $0x18] sm:$0xff]
    %v157 = vld [vmem:[#allocation7 + $0x20] sm:$0xff]
    %v158 = vld [vmem:[#allocation7 + $0x28] sm:$0xff]
    %v159 = vld [vmem:[#allocation7 + $0x30] sm:$0xff]
    %v160 = vld [vmem:[#allocation7 + $0x38] sm:$0xff]
    %v161 = vld [vmem:[#allocation7 + $0x40] sm:$0xff]
    %v162 = vld [vmem:[#allocation7 + $0x48] sm:$0xff]
    %v163 = vld [vmem:[#allocation7 + $0x50] sm:$0xff]
    %v164 = vld [vmem:[#allocation7 + $0x58] sm:$0xff]
    %v165 = vld [vmem:[#allocation7 + $0x60] sm:$0xff]
    %v166 = vld [vmem:[#allocation7 + $0x68] sm:$0xff]
    %v167 = vld [vmem:[#allocation7 + $0x70] sm:$0xff]
    %v168 = vld [vmem:[#allocation7 + $0x78] sm:$0xff]
    %v169 = vld [vmem:[%s4] sm:$0x1]
    %v171 = vperm.slane %v169, 0
    %173 = vmatpush.msra.mxu0 %v168
    %174 = vmatpush.msra.mxu0 %v167
    %175 = vmatpush.msra.mxu0 %v166
    %176 = vmatpush.msra.mxu0 %v165
    %177 = vmatpush.msra.mxu0 %v164
    %178 = vmatpush.msra.mxu0 %v163
    %179 = vmatpush.msra.mxu0 %v162
    %180 = vmatpush.msra.mxu0 %v161
    %181 = vmatpush.msra.mxu0 %v160
    %182 = vmatpush.msra.mxu0 %v159
    %183 = vmatpush.msra.mxu0 %v158
    %184 = vmatpush.msra.mxu0 %v157
    %185 = vmatpush.msra.mxu0 %v156
    %186 = vmatpush.msra.mxu0 %v155
    %187 = vmatpush.msra.mxu0 %v154
    %188 = vmatpush.msra.mxu0 %v153
    %189 = vmatmul.f32.gmra.mxu0 %v152
    %v190 = vpop.f32.mrf.mxu0
    %v191 = vadd.f32 %v171, %v190
    %192 = vdwg.mxu0
    %193 = vst [vmem:[#allocation8] sm:$0xff] %v191
    // Predicated region
    $region34: #{tpu_custom_call.1} parent=1 // pred_check
      _
    $region35: #{tpu_custom_call.1} parent=1 // pred_check_branch
      %195 = sbr.rel (0) target = $region37
    $region36: #{tpu_custom_call.1} parent=1 // pred_region
      %197 = vsyncadd [#allocation4], 96
      %s198 = sshll.u32 [#allocation8], 4
      %s199 = int_to_ptr.vmem [resolvable:$true] %s198
      %s200 = sshll.u32 %s5, 4
      %s201 = int_to_ptr.hbm [resolvable:$true] %s200
      %206 = dma.vmem_to_hbm [thread:$0]  %s199, 32, %s201, [#allocation4], 32, 32, 2
    $region37: #{tpu_custom_call.1} parent=1 // pred_fallthru
      _
    // Predicated region
    $region38: #{tpu_custom_call.1} parent=1 // pred_check
      _
    $region39: #{tpu_custom_call.1} parent=1 // pred_check_branch
      %208 = sbr.rel (0) target = $region41
    $region40: #{tpu_custom_call.1} parent=1 // pred_region
      %210 = dma.done [#allocation4], 128
    $region41: #{tpu_custom_call.1} parent=1 // pred_fallthru
      _
    %211 = vsyncpa [#allocation3], 1
    %212 = vsyncpa [#allocation6], 1
    %213 = vsyncpa [#allocation4], 1

</llo_original>
